<compile_context>
chip_gen: v7x
topology: tpu7x:2x2x1
jax: 0.10.0
libtpu: 0.0.40
codegen_flags: <defaults>
</compile_context>

<pallas_src>
import functools

import jax
import jax.numpy as jnp
from jax.experimental import pallas as pl
from jax.experimental.pallas import tpu as pltpu


def _nll_kernel(x_ref, tgt_ref, out_ref, acc_ref, *, n_rows, tile_n):
    # x_ref:   (tile_n, C) input block, native dtype, VMEM
    # tgt_ref: (tile_n, 1) int32 target block, VMEM
    # out_ref: (1, 1) f32 result, SMEM
    # acc_ref: (1, 1) f32 running sum, SMEM scratch (persists across grid steps)
    pid = pl.program_id(0)

    @pl.when(pid == 0)
    def _init():
        acc_ref[0, 0] = jnp.float32(0.0)

    x = x_ref[...]                      # (tile_n, C), native dtype
    tgt = tgt_ref[...]                  # (tile_n, 1), int32
    tn, c = x.shape

    # One-hot gather via lane-index compare (VPU), plus row-validity mask so the
    # padded rows of a partial last block contribute exactly zero.
    col = jax.lax.broadcasted_iota(jnp.int32, (tn, c), dimension=1)
    row = jax.lax.broadcasted_iota(jnp.int32, (tn, c), dimension=0)
    valid = (pid * tile_n + row) < n_rows
    hit = jnp.logical_and(col == tgt, valid)
    picked = jnp.where(hit, x.astype(jnp.float32), jnp.float32(0.0))

    # Reduce lanes first (XLU), then sublanes; accumulate the block partial sum.
    row_sums = jnp.sum(picked, axis=-1, keepdims=True)   # (tile_n, 1)
    acc_ref[0, 0] += jnp.sum(row_sums)

    @pl.when(pid == pl.num_programs(0) - 1)
    def _finalize():
        out_ref[0, 0] = -(acc_ref[0, 0] / jnp.float32(n_rows))


def _choose_tile_n(n, c, itemsize):
    # Keep one pipeline buffer around ~4 MiB: with double buffering that is well
    # under the scoped VMEM default on every generation (v5e 16 MiB, v6e/v7x 32 MiB).
    budget_bytes = 4 * 1024 * 1024
    per_row = max(c * itemsize, 1)
    t = budget_bytes // per_row
    t = int(max(8, min(t, 1024)))
    t = (t // 8) * 8                    # sublane alignment for the (8, 128) rule
    if t >= n:
        return n                        # single block == full array dim (always legal)
    return t


def negative_log_likelihood(input_tensor, target_tensor, *, tile_n=None):
    """Pallas TPU implementation of -input[range(N), target].mean()."""
    n, c = input_tensor.shape
    x = input_tensor                                   # native dtype; cast happens in-kernel
    tgt2d = target_tensor.astype(jnp.int32).reshape(n, 1)

    if tile_n is None:
        tile_n = _choose_tile_n(n, c, jnp.dtype(x.dtype).itemsize)
    tile_n = int(min(tile_n, n))
    if tile_n < n and tile_n % 8 != 0:
        tile_n = min(n, max(8, (tile_n // 8) * 8))

    grid = (pl.cdiv(n, tile_n),)
    kernel = functools.partial(_nll_kernel, n_rows=n, tile_n=tile_n)

    out = pl.pallas_call(
        kernel,
        out_shape=jax.ShapeDtypeStruct((1, 1), jnp.float32),
        grid=grid,
        in_specs=[
            pl.BlockSpec((tile_n, c), lambda i: (i, 0)),   # input rows, full class width
            pl.BlockSpec((tile_n, 1), lambda i: (i, 0)),   # matching target rows
        ],
        out_specs=pl.BlockSpec(memory_space=pltpu.SMEM),   # (1,1) scalar result
        scratch_shapes=[pltpu.SMEM((1, 1), jnp.float32)],  # running sum across grid steps
        compiler_params=pltpu.CompilerParams(
            dimension_semantics=("arbitrary",),            # reduction axis: sequential
            vmem_limit_bytes=32 * 1024 * 1024,
        ),
    )(x, tgt2d)
    return out[0, 0]


if __name__ == "__main__":
    key = jax.random.PRNGKey(0)
    k_x, k_t = jax.random.split(key)

    # Test 1: single block (N=8, C=32), float32.
    N, C = 8, 32
    x = jax.random.normal(k_x, (N, C), dtype=jnp.float32)        # e.g. log-probabilities
    tgt = jax.random.randint(k_t, (N,), 0, C, dtype=jnp.int32)   # class indices
    loss = jax.block_until_ready(negative_log_likelihood(x, tgt))
    ref = -jnp.mean(x[jnp.arange(N), tgt])
    assert jnp.allclose(loss, ref, atol=1e-6, rtol=1e-6), (loss, ref)

    # Test 2: multi-block grid with a partial last block (N=20, tile_n=8 -> grid=3),
    # exercising accumulator init/finalize and padded-row masking.
    N2, C2 = 20, 32
    k_x2, k_t2 = jax.random.split(jax.random.PRNGKey(1))
    x2 = jax.random.normal(k_x2, (N2, C2), dtype=jnp.float32)
    tgt2 = jax.random.randint(k_t2, (N2,), 0, C2, dtype=jnp.int32)
    loss2 = jax.block_until_ready(negative_log_likelihood(x2, tgt2, tile_n=8))
    ref2 = -jnp.mean(x2[jnp.arange(N2), tgt2])
    assert jnp.allclose(loss2, ref2, atol=1e-6, rtol=1e-6), (loss2, ref2)

    # Test 3: bf16 input passes through without a wrapper upcast (cast is in-vreg).
    x_bf = x.astype(jnp.bfloat16)
    loss_bf = jax.block_until_ready(negative_log_likelihood(x_bf, tgt))
    ref_bf = -jnp.mean(x_bf[jnp.arange(N), tgt].astype(jnp.float32))
    assert jnp.allclose(loss_bf, ref_bf, atol=1e-2, rtol=1e-2), (loss_bf, ref_bf)

    print("KERNEL_OK")
</pallas_src>

<mosaic_0001>
module attributes {stable_mosaic.version = 11 : i64} {
  func.func @_nll_kernel(%arg0: i32, %arg1: memref<8x32xf32, #tpu.memory_space<vmem>>, %arg2: memref<8x1xi32, #tpu.memory_space<vmem>>, %arg3: memref<1x1xf32, #tpu.memory_space<smem>>, %arg4: memref<1x1xf32, #tpu.memory_space<smem>>) attributes {dimension_semantics = [#tpu.dimension_semantics<arbitrary>], iteration_bounds = array<i64: 1>, scalar_prefetch = 0 : i64, scratch_operands = 1 : i64, tpu.core_type = #tpu.core_type<tc>, window_params = [{transform_indices = @transform_0, window_bounds = array<i64: 8, 32>}, {transform_indices = @transform_1, window_bounds = array<i64: 8, 1>}, {transform_indices = @transform_2, window_bounds = array<i64: 1, 1>}]} {
    %c0_i32 = arith.constant 0 : i32
    %0 = arith.cmpi eq, %arg0, %c0_i32 : i32
    %1 = arith.extui %0 : i1 to i32
    %c0_i32_0 = arith.constant 0 : i32
    %2 = arith.cmpi ne, %1, %c0_i32_0 : i32
    scf.if %2 {
      %cst_13 = arith.constant 0.000000e+00 : f32
      %c0_14 = arith.constant 0 : index
      %c0_15 = arith.constant 0 : index
      %29 = memref.load %arg4[%c0_14, %c0_15] : memref<1x1xf32, #tpu.memory_space<smem>>
      memref.store %cst_13, %arg4[%c0_14, %c0_15] : memref<1x1xf32, #tpu.memory_space<smem>>
    } else {
    }
    %c0 = arith.constant 0 : index
    %c0_1 = arith.constant 0 : index
    %3 = vector.load %arg1[%c0, %c0_1] : memref<8x32xf32, #tpu.memory_space<vmem>>, vector<8x32xf32>
    %c0_2 = arith.constant 0 : index
    %c0_3 = arith.constant 0 : index
    %4 = vector.load %arg2[%c0_2, %c0_3] : memref<8x1xi32, #tpu.memory_space<vmem>>, vector<8x1xi32>
    %5 = tpu.iota {dimensions = array<i32: 1>} : vector<8x32xi32>
    %6 = tpu.iota {dimensions = array<i32: 0>} : vector<8x32xi32>
    %c8_i32 = arith.constant 8 : i32
    %7 = arith.muli %arg0, %c8_i32 : i32
    %8 = vector.broadcast %7 : i32 to vector<8x32xi32>
    %9 = arith.addi %8, %6 : vector<8x32xi32>
    %c8_i32_4 = arith.constant 8 : i32
    %10 = vector.broadcast %c8_i32_4 : i32 to vector<8x32xi32>
    %11 = arith.cmpi slt, %9, %10 : vector<8x32xi32>
    %12 = vector.broadcast %4 : vector<8x1xi32> to vector<8x32xi32>
    %13 = arith.cmpi eq, %5, %12 : vector<8x32xi32>
    %14 = arith.andi %13, %11 : vector<8x32xi1>
    %cst = arith.constant 0.000000e+00 : f32
    %15 = vector.broadcast %cst : f32 to vector<8x32xf32>
    %16 = arith.select %14, %3, %15 : vector<8x32xi1>, vector<8x32xf32>
    %cst_5 = arith.constant dense<0.000000e+00> : vector<8xf32>
    %17 = vector.multi_reduction <add>, %16, %cst_5 [1] : vector<8x32xf32> to vector<8xf32>
    %18 = vector.shape_cast %17 : vector<8xf32> to vector<8x1xf32>
    %c0_6 = arith.constant 0 : index
    %c0_7 = arith.constant 0 : index
    %19 = memref.load %arg4[%c0_6, %c0_7] : memref<1x1xf32, #tpu.memory_space<smem>>
    %20 = vector.shape_cast %18 : vector<8x1xf32> to vector<1x8x1xf32>
    %cst_8 = arith.constant dense<0.000000e+00> : vector<1xf32>
    %21 = vector.multi_reduction <add>, %20, %cst_8 [1, 2] : vector<1x8x1xf32> to vector<1xf32>
    %22 = vector.shape_cast %21 : vector<1xf32> to vector<1x1x1xf32>
    %23 = vector.extract %22[0, 0, 0] : f32 from vector<1x1x1xf32>
    %24 = arith.addf %19, %23 : f32
    %c0_9 = arith.constant 0 : index
    %c0_10 = arith.constant 0 : index
    %25 = memref.load %arg4[%c0_9, %c0_10] : memref<1x1xf32, #tpu.memory_space<smem>>
    memref.store %24, %arg4[%c0_9, %c0_10] : memref<1x1xf32, #tpu.memory_space<smem>>
    %c0_i32_11 = arith.constant 0 : i32
    %26 = arith.cmpi eq, %arg0, %c0_i32_11 : i32
    %27 = arith.extui %26 : i1 to i32
    %c0_i32_12 = arith.constant 0 : i32
    %28 = arith.cmpi ne, %27, %c0_i32_12 : i32
    scf.if %28 {
      %c0_13 = arith.constant 0 : index
      %c0_14 = arith.constant 0 : index
      %29 = memref.load %arg4[%c0_13, %c0_14] : memref<1x1xf32, #tpu.memory_space<smem>>
      %cst_15 = arith.constant 8.000000e+00 : f32
      %30 = arith.divf %29, %cst_15 : f32
      %cst_16 = arith.constant 0.000000e+00 : f32
      %31 = arith.subf %cst_16, %30 : f32
      %c0_17 = arith.constant 0 : index
      %c0_18 = arith.constant 0 : index
      %32 = memref.load %arg3[%c0_17, %c0_18] : memref<1x1xf32, #tpu.memory_space<smem>>
      memref.store %31, %arg3[%c0_17, %c0_18] : memref<1x1xf32, #tpu.memory_space<smem>>
    } else {
    }
    return
  }
  func.func @transform_0(%arg0: i32) -> (i32, i32) {
    %c0_i32 = arith.constant 0 : i32
    %c0_i32_0 = arith.constant 0 : i32
    return %arg0, %c0_i32 : i32, i32
  }
  func.func @transform_1(%arg0: i32) -> (i32, i32) {
    %c0_i32 = arith.constant 0 : i32
    %c0_i32_0 = arith.constant 0 : i32
    return %arg0, %c0_i32 : i32, i32
  }
  func.func @transform_2(%arg0: i32) -> (i32, i32) {
    %c0_i32 = arith.constant 0 : i32
    %c0_i32_0 = arith.constant 0 : i32
    %c0_i32_1 = arith.constant 0 : i32
    return %c0_i32, %c0_i32_0 : i32, i32
  }
}

</mosaic_0001>

<llo_original>
// kernel: tpu_custom_call.1
$region0: #{tpu_custom_call.1}
  #allocation0 [shape = 'u32[]', space=smem, size = 0x4, offset = 0x4, fixed_abs, tag = 'smem constant byte address 0x4 - core index']
  #allocation1 [shape = 'u32[144,128]{1,0:T(1,128)}', space=vmem, size = 0x12000, scoped, tag = 'internal scratch']
  #allocation2 [shape = 'f32[1,1]{1,0:T(1,128)}', space=smem, size = 0x200, scoped, tag = 'scratch operand']
  %s0 = inlined_call_operand.vmem [shape: f32[8,32], index: 0, kind: input, shape index: {}]
  %s1 = inlined_call_operand.vmem [shape: s32[8,1], index: 1, kind: input, shape index: {}]
  %s2 = inlined_call_operand.hbm [shape: f32[1,1], index: 2, kind: output, shape index: {}]
  %s3 = sld [smem:[#allocation0]]
  $region26: #{tpu_custom_call.1} parent=0
    _
  %s5 = ssub.s32 1, %s3
  %s6 = scalar_select 0, %s5, %s3
  $region1: #{tpu_custom_call.1} parent=0
    #allocation3 [shape = 'u8[512]{0}', space=smem, size = 0x200, scoped, tag = 'output window, operand 0, single buffered']
    #allocation4 [shape = 's32[1]{0}', space=sflag, size = 0x4, scoped, tag = 'scoped memory for tpu_custom_call.1']
    %7 = vsyncpa [#allocation4], 0
    // Predicated region
    $region2: #{tpu_custom_call.1} parent=1 // pred_check
      _
    $region3: #{tpu_custom_call.1} parent=1 // pred_check_branch
      %9 = sbr.rel (0) target = $region5
    $region4: #{tpu_custom_call.1} parent=1 // pred_region
      _
    $region5: #{tpu_custom_call.1} parent=1 // pred_fallthru
      _
    // Predicated region
    $region6: #{tpu_custom_call.1} parent=1 // pred_check
      _
    $region7: #{tpu_custom_call.1} parent=1 // pred_check_branch
      %11 = sbr.rel (0) target = $region9
    $region8: #{tpu_custom_call.1} parent=1 // pred_region
      _
    $region9: #{tpu_custom_call.1} parent=1 // pred_fallthru
      _
    %p12 = scmp.eq.s32.totalorder 0, 0
    // Predicated region
    $region10: #{tpu_custom_call.1} parent=1 // pred_check
      %p13 = pneg %p12
    $region11: #{tpu_custom_call.1} parent=1 // pred_check_branch
      %15 = sbr.rel (%p13) target = $region13
    $region12: #{tpu_custom_call.1} parent=1 // pred_region
      %s16 = scalar_lea.smem [#allocation2], 0
      %17 = sst [smem:[%s16]] 0.0
    $region13: #{tpu_custom_call.1} parent=1 // pred_fallthru
      _
    %v18 = vld [vmem:[%s0] sm:$0xff]
    %v19 = vld [vmem:[%s1] sm:$0xff]
    %v20 = vlaneseq
    %v21 = vand.u32 %v20, 127
    %v22 = vlaneseq
    %v23 = vshrl.u32 %v22, 7
    %s24 = smul.u32 0, 8
    %v25 = vstv %s24
    %v26 = vadd.s32 %v25, %v23
    %vm27 = vcmp.lt.s32.totalorder %v26, 8
    %28 = vset.pattern.permute.xlu0 0
    %29 = vperm.xlu0 %28, %v19
    %v30 = vpop.permute.xlu0 %29
    %vm31 = vcmp.eq.s32.totalorder %v21, %v30
    %vm32 = vmand %vm31, %vm27
    %v33 = vsel %vm32, %v18, 0.0
    %vm34 = vcmask 261120
    %v35 = vsel %vm34, %v33, 0.0
    %36 = vadd.xlane.f32.xlu0 %v35
    %v37 = vpop.xlane.xlu0 %36
    %s38 = sld [smem:[#allocation2]]
    %vm39 = vcmask 7168
    %v40 = vsel %vm39, %v37, 0.0
    %41 = vadd.xlane.f32.xlu0 %v40
    %v42 = vpop.xlane.xlu0 %41
    %v43 = vrot.slane %v42, 4
    %v44 = vadd.f32 %v42, %v43
    %v45 = vrot.slane %v44, 2
    %v46 = vadd.f32 %v44, %v45
    %v47 = vrot.slane %v46, 1
    %v48 = vadd.f32 %v46, %v47
    %s49 = vtos %v48
    %s50 = sadd.f32 %s38, %s49
    %s51 = scalar_lea.smem [#allocation2], 0
    %52 = sst [smem:[%s51]] %s50
    // Predicated region
    $region14: #{tpu_custom_call.1} parent=1 // pred_check
      %p53 = pneg %p12
    $region15: #{tpu_custom_call.1} parent=1 // pred_check_branch
      %55 = sbr.rel (%p53) target = $region17
    $region16: #{tpu_custom_call.1} parent=1 // pred_region
      %s56 = sld [smem:[#allocation2]]
      %v57 = vrcp.pop 8.0
      %s58 = vtos %v57
      %s59 = smul.f32 %s56, %s58
      %s60 = ssub.f32 0.0, %s59
      %s61 = scalar_lea.smem [#allocation3], 0
      %62 = sst [smem:[%s61]] %s60
    $region17: #{tpu_custom_call.1} parent=1 // pred_fallthru
      _
    // Predicated region
    $region18: #{tpu_custom_call.1} parent=1 // pred_check
      _
    $region19: #{tpu_custom_call.1} parent=1 // pred_check_branch
      %64 = sbr.rel (0) target = $region21
    $region20: #{tpu_custom_call.1} parent=1 // pred_region
      %s66 = ssub.s32 16, 16
      %67 = vsyncadd [#allocation4], %s66
      %70 = dma.smem_to_hbm [#allocation3], 16, %s2, [#allocation4]
    $region21: #{tpu_custom_call.1} parent=1 // pred_fallthru
      _
    // Predicated region
    $region22: #{tpu_custom_call.1} parent=1 // pred_check
      _
    $region23: #{tpu_custom_call.1} parent=1 // pred_check_branch
      %72 = sbr.rel (0) target = $region25
    $region24: #{tpu_custom_call.1} parent=1 // pred_region
      %73 = dma.done [#allocation4], 16
    $region25: #{tpu_custom_call.1} parent=1 // pred_fallthru
      _
    %74 = sfence
    %75 = vsyncpa [#allocation4], 1

</llo_original>
